<compile_context>
chip_gen: v7x
topology: tpu7x:2x2x1
jax: 0.10.0
libtpu: 0.0.40
codegen_flags: <defaults>
</compile_context>

<pallas_src>
import functools

import jax
import jax.numpy as jnp
from jax.experimental import pallas as pl
from jax.experimental.pallas import tpu as pltpu

F_PAD = 128  # lane-dense feature width (all layer widths <= 128)


def _gcn_net_kernel(a_ref, x_ref, w_ref, b_ref, out_ref, *, d_x, d_y):
    # a_ref : (G, N, N)      bf16  normalized adjacency per in-block graph
    # x_ref : (G*N, Fin8)    f32   node features at (near-)native width
    # w_ref : (4, 128, 128)  bf16  weights; layer 3 pre-shifted to cols d_x:
    # b_ref : (8, 128)       f32   biases in rows 0..3 (layer 3 pre-shifted)
    # out_ref: (G*N, 128)    f32   packed output: x in cols [0,d_x), y in
    #                              cols [d_x, d_x+d_y), zeros elsewhere
    G, N, _ = a_ref.shape
    GN, F = out_ref.shape

    a = a_ref[...]                                    # (G, N, N) bf16

    def aggregate(hw):
        # per-graph A_hat @ hw, batched over the G in-block graphs
        hw3 = hw.reshape(G, N, F).astype(jnp.bfloat16)
        agg = jnp.einsum("gij,gjf->gif", a, hw3,
                         preferred_element_type=jnp.float32)
        return agg.reshape(GN, F)

    def gcn(h, layer):
        # A_hat @ (h @ W) + b — MXU in bf16, accumulate in f32
        hw = jnp.dot(h.astype(jnp.bfloat16), w_ref[layer],
                     preferred_element_type=jnp.float32)
        return aggregate(hw) + b_ref[pl.ds(layer, 1), :]

    # Layer 1: contract over the native input width (w rows >= Fin are zero).
    x2d = x_ref[...]
    fin = x2d.shape[1]
    w0 = w_ref[0][:fin, :]
    hw0 = jnp.dot(x2d.astype(jnp.bfloat16), w0,
                  preferred_element_type=jnp.float32)
    h = jnp.tanh(aggregate(hw0) + b_ref[pl.ds(0, 1), :])   # conv1
    h = jnp.tanh(gcn(h, 1))                                 # conv2
    h = jnp.tanh(gcn(h, 2))                                 # conv3 -> `x` (cols 0:d_x)

    y = gcn(h, 3)                # conv4 lands directly in cols d_x:d_x+d_y
    col = jax.lax.broadcasted_iota(jnp.int32, (GN, F), 1)
    valid_y = jnp.logical_and(col >= d_x, col < d_x + d_y)
    y = jnp.where(valid_y, y, -1e30)
    m = jnp.max(y, axis=1, keepdims=True)
    lse = jnp.log(jnp.sum(jnp.exp(y - m), axis=1, keepdims=True)) + m
    y_ls = jnp.where(valid_y, y - lse, 0.0)

    # Single lane-dense slab: x in [0,d_x), log_softmax(y) in [d_x,d_x+d_y).
    out_ref[...] = jnp.where(col < d_x, h, y_ls)


def prepare_params(params):
    """One-time packing of per-layer (W, b) into lane-dense slabs.

    The final layer's weight/bias are placed at columns [d_x, d_x+d_y) so the
    kernel's conv4 output lands directly in its slot of the packed output slab
    (no in-kernel lane rotation needed).
    """
    n_layers = len(params)
    d_x = params[-1][0].shape[0]          # conv4 input dim == conv3 output dim
    w_slab = jnp.zeros((n_layers, F_PAD, F_PAD), jnp.float32)
    b_slab = jnp.zeros((8, F_PAD), jnp.float32)
    for i, (w, b) in enumerate(params):
        fi, fo = w.shape
        off = d_x if i == n_layers - 1 else 0
        w_slab = w_slab.at[i, :fi, off:off + fo].set(w)
        b_slab = b_slab.at[i, off:off + fo].set(b.reshape(-1))
    return w_slab.astype(jnp.bfloat16), b_slab   # bf16 weights feed the MXU


def net_forward(a_hat, x, w_slab, b_slab, *, d_x, d_y, graphs_per_step=None):
    """Fused GCN forward for a batch of graphs.

    a_hat : (B, N, N) bf16 (or f32, cast here) dense normalized adjacency
    x     : (B, N, Fin) f32 node features
    w_slab/b_slab : from prepare_params
    returns (x_out (B,N,d_x), y_out (B,N,d_y)) matching Net.forward.
    """
    B, N, fin = x.shape
    assert a_hat.shape == (B, N, N)
    n_layers = w_slab.shape[0]

    a_hat = a_hat.astype(jnp.bfloat16)        # no-op if already stored as bf16

    # Pad feature width only up to a sublane multiple (not to 128).
    fin8 = -(-fin // 8) * 8
    if fin8 != fin:
        x = jnp.pad(x, ((0, 0), (0, 0), (0, fin8 - fin)))
    x2d = x.reshape(B * N, fin8)

    # G graphs per grid step; keep the grid length even (>=2) for v7x's 2 TCs.
    if graphs_per_step is None:
        graphs_per_step = B // 2 if (B % 2 == 0 and B >= 2) else B
    G = graphs_per_step
    assert B % G == 0, "batch size must be divisible by graphs_per_step"
    steps = B // G
    GN = G * N

    flops = B * n_layers * (2 * N * F_PAD * F_PAD + 2 * N * N * F_PAD)
    transcendentals = B * N * 4 * F_PAD
    bytes_accessed = (a_hat.size * a_hat.dtype.itemsize + x2d.size * 4
                      + w_slab.size * 2 + b_slab.size * 4
                      + B * N * F_PAD * 4)

    kernel = functools.partial(_gcn_net_kernel, d_x=d_x, d_y=d_y)
    out = pl.pallas_call(
        kernel,
        out_shape=jax.ShapeDtypeStruct((B * N, F_PAD), jnp.float32),
        grid=(steps,),
        in_specs=[
            pl.BlockSpec((G, N, N), lambda i: (i, 0, 0)),        # bf16 A_hat
            pl.BlockSpec((GN, fin8), lambda i: (i, 0)),          # features
            # Grid-invariant weight/bias slabs (constant index_map -> one DMA
            # per buffer; the extra default pipeline buffer is ~132 KiB, kept
            # for lowering safety rather than pl.Buffered(1)).
            pl.BlockSpec((n_layers, F_PAD, F_PAD), lambda i: (0, 0, 0)),
            pl.BlockSpec((8, F_PAD), lambda i: (0, 0)),
        ],
        out_specs=pl.BlockSpec((GN, F_PAD), lambda i: (i, 0)),
        compiler_params=pltpu.CompilerParams(
            dimension_semantics=("parallel",)),
        cost_estimate=pl.CostEstimate(
            flops=flops, transcendentals=transcendentals,
            bytes_accessed=bytes_accessed),
    )(a_hat, x2d, w_slab, b_slab)

    out = out.reshape(B, N, F_PAD)
    return out[:, :, :d_x], out[:, :, d_x:d_x + d_y]


def normalized_adjacency(edge_index, num_nodes):
    """Dense A_hat = D^{-1/2} (A + I) D^{-1/2} from a (2, E) int edge_index."""
    src, dst = edge_index[0], edge_index[1]
    a = jnp.zeros((num_nodes, num_nodes), jnp.float32).at[dst, src].add(1.0)
    a = a + jnp.eye(num_nodes, dtype=jnp.float32)
    deg = jnp.sum(a, axis=1)
    d_inv_sqrt = jax.lax.rsqrt(deg)
    return a * d_inv_sqrt[:, None] * d_inv_sqrt[None, :]


def init_params(key, dims):
    """Glorot-uniform weights, zero biases (deterministic)."""
    params = []
    keys = jax.random.split(key, len(dims))
    for k, (fi, fo) in zip(keys, dims):
        limit = (6.0 / (fi + fo)) ** 0.5
        w = jax.random.uniform(k, (fi, fo), jnp.float32, -limit, limit)
        b = jnp.zeros((fo,), jnp.float32)
        params.append((w, b))
    return params


def net_reference(a_hat, x, params):
    """Pure-JAX f32 reference of Net.forward (batched)."""
    def gcn(h, w, b):
        return jnp.einsum("bij,bjf->bif", a_hat, h @ w) + b
    h = jnp.tanh(gcn(x, *params[0]))
    h = jnp.tanh(gcn(h, *params[1]))
    h = jnp.tanh(gcn(h, *params[2]))
    y = gcn(h, *params[3])
    y = y - jax.scipy.special.logsumexp(y, axis=-1, keepdims=True)
    return h, y


if __name__ == "__main__":
    key = jax.random.PRNGKey(0)
    k_x, k_w = jax.random.split(key)

    B = 4          # graphs; G=2 per grid step -> grid (2,), both v7x TCs busy
    N = 8          # nodes per graph
    n_feat = 16    # input feature dim `n` of Net(n)

    # data.feature : (B, N, n) node features
    x = jax.random.normal(k_x, (B, N, n_feat), dtype=jnp.float32)

    # data.edge_index : (2, E) — small scale-free-ish graph (node 0 is a hub),
    # made undirected by including both directions.
    src = jnp.array([0, 0, 0, 0, 0, 1, 2, 3, 4, 5, 6], dtype=jnp.int32)
    dst = jnp.array([1, 2, 3, 4, 5, 2, 3, 4, 5, 6, 7], dtype=jnp.int32)
    edge_index = jnp.stack([jnp.concatenate([src, dst]),
                            jnp.concatenate([dst, src])])
    a_hat = normalized_adjacency(edge_index, N)
    a_hat_f32 = jnp.stack([a_hat] * B)            # f32 copy for the reference
    a_hat_bf16 = a_hat_f32.astype(jnp.bfloat16)   # bf16 stored in HBM for the kernel

    # Layer dims from Net.__init__: n->32, 32->4, 4->2, 2->4
    params = init_params(k_w, [(n_feat, 32), (32, 4), (4, 2), (2, 4)])
    d_x = params[3][0].shape[0]   # 2  (conv3 output dim)
    d_y = params[3][0].shape[1]   # 4  (conv4 output dim)

    # One-time parameter packing (hoisted out of the forward hot path).
    w_slab, b_slab = prepare_params(params)

    fwd = jax.jit(functools.partial(net_forward, d_x=d_x, d_y=d_y,
                                    graphs_per_step=2))
    x_out, y_out = fwd(a_hat_bf16, x, w_slab, b_slab)
    jax.block_until_ready((x_out, y_out))

    assert x_out.shape == (B, N, d_x) and y_out.shape == (B, N, d_y)

    # Loose numerical check vs. f32 reference (kernel uses bf16 MXU inputs).
    x_ref, y_ref = net_reference(a_hat_f32, x, params)
    assert jnp.max(jnp.abs(x_out - x_ref)) < 0.1
    assert jnp.max(jnp.abs(y_out - y_ref)) < 0.1

    print("KERNEL_OK")
</pallas_src>

<mosaic_0001>
module attributes {stable_mosaic.version = 11 : i64} {
  func.func @_gcn_net_kernel(%arg0: i32, %arg1: memref<2x8x8xbf16, #tpu.memory_space<vmem>>, %arg2: memref<16x16xf32, #tpu.memory_space<vmem>>, %arg3: memref<4x128x128xbf16, #tpu.memory_space<vmem>>, %arg4: memref<8x128xf32, #tpu.memory_space<vmem>>, %arg5: memref<16x128xf32, #tpu.memory_space<vmem>>) attributes {dimension_semantics = [#tpu.dimension_semantics<parallel>], iteration_bounds = array<i64: 2>, scalar_prefetch = 0 : i64, scratch_operands = 0 : i64, tpu.core_type = #tpu.core_type<tc>, window_params = [{transform_indices = @transform_0, window_bounds = array<i64: 2, 8, 8>}, {transform_indices = @transform_1, window_bounds = array<i64: 16, 16>}, {pipeline_mode = #tpu.pipeline_mode<synchronous>, transform_indices = @transform_2, window_bounds = array<i64: 4, 128, 128>}, {pipeline_mode = #tpu.pipeline_mode<synchronous>, transform_indices = @transform_3, window_bounds = array<i64: 8, 128>}, {transform_indices = @transform_4, window_bounds = array<i64: 16, 128>}]} {
    %c0 = arith.constant 0 : index
    %c0_0 = arith.constant 0 : index
    %c0_1 = arith.constant 0 : index
    %0 = vector.load %arg1[%c0, %c0_0, %c0_1] : memref<2x8x8xbf16, #tpu.memory_space<vmem>>, vector<2x8x8xbf16>
    %c0_2 = arith.constant 0 : index
    %c0_3 = arith.constant 0 : index
    %1 = vector.load %arg2[%c0_2, %c0_3] : memref<16x16xf32, #tpu.memory_space<vmem>>, vector<16x16xf32>
    %c0_4 = arith.constant 0 : index
    %c0_5 = arith.constant 0 : index
    %c0_6 = arith.constant 0 : index
    %2 = vector.load %arg3[%c0_4, %c0_5, %c0_6] : memref<4x128x128xbf16, #tpu.memory_space<vmem>>, vector<1x128x128xbf16>
    %3 = vector.shape_cast %2 : vector<1x128x128xbf16> to vector<128x128xbf16>
    %4 = vector.extract_strided_slice %3 {offsets = [0, 0], sizes = [16, 128], strides = [1, 1]} : vector<128x128xbf16> to vector<16x128xbf16>
    %5 = arith.truncf %1 : vector<16x16xf32> to vector<16x16xbf16>
    %cst = arith.constant dense<0.000000e+00> : vector<16x128xf32>
    %6 = tpu.matmul %5, %4, %cst {dimension_numbers = #tpu.dot_dimension_numbers<[1], [0], [0], [1], [0, 0, 1, 1], [], []>} : vector<16x16xbf16>, vector<16x128xbf16>, vector<16x128xf32> -> vector<16x128xf32>
    %7 = vector.shape_cast %6 : vector<16x128xf32> to vector<2x8x128xf32>
    %8 = arith.truncf %7 : vector<2x8x128xf32> to vector<2x8x128xbf16>
    "tpu.trace_start"() <{level = 10 : i32, message = "gij,gjf->gif"}> : () -> ()
    %cst_7 = arith.constant dense<0.000000e+00> : vector<2x8x128xf32>
    %9 = tpu.matmul %0, %8, %cst_7 {dimension_numbers = #tpu.dot_dimension_numbers<[2], [1], [1], [2], [0, 0, 0, 1, 1, 2], [0], [0]>} : vector<2x8x8xbf16>, vector<2x8x128xbf16>, vector<2x8x128xf32> -> vector<2x8x128xf32>
    "tpu.trace_stop"() : () -> ()
    %10 = vector.shape_cast %9 : vector<2x8x128xf32> to vector<16x128xf32>
    %c0_8 = arith.constant 0 : index
    %c0_9 = arith.constant 0 : index
    %11 = vector.load %arg4[%c0_8, %c0_9] : memref<8x128xf32, #tpu.memory_space<vmem>>, vector<1x128xf32>
    %12 = vector.broadcast %11 : vector<1x128xf32> to vector<16x128xf32>
    %13 = arith.addf %10, %12 : vector<16x128xf32>
    %14 = math.tanh %13 : vector<16x128xf32>
    %15 = arith.truncf %14 : vector<16x128xf32> to vector<16x128xbf16>
    %c1 = arith.constant 1 : index
    %c0_10 = arith.constant 0 : index
    %c0_11 = arith.constant 0 : index
    %16 = vector.load %arg3[%c1, %c0_10, %c0_11] : memref<4x128x128xbf16, #tpu.memory_space<vmem>>, vector<1x128x128xbf16>
    %17 = vector.shape_cast %16 : vector<1x128x128xbf16> to vector<128x128xbf16>
    %cst_12 = arith.constant dense<0.000000e+00> : vector<16x128xf32>
    %18 = tpu.matmul %15, %17, %cst_12 {dimension_numbers = #tpu.dot_dimension_numbers<[1], [0], [0], [1], [0, 0, 1, 1], [], []>} : vector<16x128xbf16>, vector<128x128xbf16>, vector<16x128xf32> -> vector<16x128xf32>
    %19 = vector.shape_cast %18 : vector<16x128xf32> to vector<2x8x128xf32>
    %20 = arith.truncf %19 : vector<2x8x128xf32> to vector<2x8x128xbf16>
    "tpu.trace_start"() <{level = 10 : i32, message = "gij,gjf->gif"}> : () -> ()
    %cst_13 = arith.constant dense<0.000000e+00> : vector<2x8x128xf32>
    %21 = tpu.matmul %0, %20, %cst_13 {dimension_numbers = #tpu.dot_dimension_numbers<[2], [1], [1], [2], [0, 0, 0, 1, 1, 2], [0], [0]>} : vector<2x8x8xbf16>, vector<2x8x128xbf16>, vector<2x8x128xf32> -> vector<2x8x128xf32>
    "tpu.trace_stop"() : () -> ()
    %22 = vector.shape_cast %21 : vector<2x8x128xf32> to vector<16x128xf32>
    %c1_14 = arith.constant 1 : index
    %c0_15 = arith.constant 0 : index
    %23 = vector.load %arg4[%c1_14, %c0_15] : memref<8x128xf32, #tpu.memory_space<vmem>>, vector<1x128xf32>
    %24 = vector.broadcast %23 : vector<1x128xf32> to vector<16x128xf32>
    %25 = arith.addf %22, %24 : vector<16x128xf32>
    %26 = math.tanh %25 : vector<16x128xf32>
    %27 = arith.truncf %26 : vector<16x128xf32> to vector<16x128xbf16>
    %c2 = arith.constant 2 : index
    %c0_16 = arith.constant 0 : index
    %c0_17 = arith.constant 0 : index
    %28 = vector.load %arg3[%c2, %c0_16, %c0_17] : memref<4x128x128xbf16, #tpu.memory_space<vmem>>, vector<1x128x128xbf16>
    %29 = vector.shape_cast %28 : vector<1x128x128xbf16> to vector<128x128xbf16>
    %cst_18 = arith.constant dense<0.000000e+00> : vector<16x128xf32>
    %30 = tpu.matmul %27, %29, %cst_18 {dimension_numbers = #tpu.dot_dimension_numbers<[1], [0], [0], [1], [0, 0, 1, 1], [], []>} : vector<16x128xbf16>, vector<128x128xbf16>, vector<16x128xf32> -> vector<16x128xf32>
    %31 = vector.shape_cast %30 : vector<16x128xf32> to vector<2x8x128xf32>
    %32 = arith.truncf %31 : vector<2x8x128xf32> to vector<2x8x128xbf16>
    "tpu.trace_start"() <{level = 10 : i32, message = "gij,gjf->gif"}> : () -> ()
    %cst_19 = arith.constant dense<0.000000e+00> : vector<2x8x128xf32>
    %33 = tpu.matmul %0, %32, %cst_19 {dimension_numbers = #tpu.dot_dimension_numbers<[2], [1], [1], [2], [0, 0, 0, 1, 1, 2], [0], [0]>} : vector<2x8x8xbf16>, vector<2x8x128xbf16>, vector<2x8x128xf32> -> vector<2x8x128xf32>
    "tpu.trace_stop"() : () -> ()
    %34 = vector.shape_cast %33 : vector<2x8x128xf32> to vector<16x128xf32>
    %c2_20 = arith.constant 2 : index
    %c0_21 = arith.constant 0 : index
    %35 = vector.load %arg4[%c2_20, %c0_21] : memref<8x128xf32, #tpu.memory_space<vmem>>, vector<1x128xf32>
    %36 = vector.broadcast %35 : vector<1x128xf32> to vector<16x128xf32>
    %37 = arith.addf %34, %36 : vector<16x128xf32>
    %38 = math.tanh %37 : vector<16x128xf32>
    %39 = arith.truncf %38 : vector<16x128xf32> to vector<16x128xbf16>
    %c3 = arith.constant 3 : index
    %c0_22 = arith.constant 0 : index
    %c0_23 = arith.constant 0 : index
    %40 = vector.load %arg3[%c3, %c0_22, %c0_23] : memref<4x128x128xbf16, #tpu.memory_space<vmem>>, vector<1x128x128xbf16>
    %41 = vector.shape_cast %40 : vector<1x128x128xbf16> to vector<128x128xbf16>
    %cst_24 = arith.constant dense<0.000000e+00> : vector<16x128xf32>
    %42 = tpu.matmul %39, %41, %cst_24 {dimension_numbers = #tpu.dot_dimension_numbers<[1], [0], [0], [1], [0, 0, 1, 1], [], []>} : vector<16x128xbf16>, vector<128x128xbf16>, vector<16x128xf32> -> vector<16x128xf32>
    %43 = vector.shape_cast %42 : vector<16x128xf32> to vector<2x8x128xf32>
    %44 = arith.truncf %43 : vector<2x8x128xf32> to vector<2x8x128xbf16>
    "tpu.trace_start"() <{level = 10 : i32, message = "gij,gjf->gif"}> : () -> ()
    %cst_25 = arith.constant dense<0.000000e+00> : vector<2x8x128xf32>
    %45 = tpu.matmul %0, %44, %cst_25 {dimension_numbers = #tpu.dot_dimension_numbers<[2], [1], [1], [2], [0, 0, 0, 1, 1, 2], [0], [0]>} : vector<2x8x8xbf16>, vector<2x8x128xbf16>, vector<2x8x128xf32> -> vector<2x8x128xf32>
    "tpu.trace_stop"() : () -> ()
    %46 = vector.shape_cast %45 : vector<2x8x128xf32> to vector<16x128xf32>
    %c3_26 = arith.constant 3 : index
    %c0_27 = arith.constant 0 : index
    %47 = vector.load %arg4[%c3_26, %c0_27] : memref<8x128xf32, #tpu.memory_space<vmem>>, vector<1x128xf32>
    %48 = vector.broadcast %47 : vector<1x128xf32> to vector<16x128xf32>
    %49 = arith.addf %46, %48 : vector<16x128xf32>
    %50 = tpu.iota {dimensions = array<i32: 1>} : vector<16x128xi32>
    %c2_i32 = arith.constant 2 : i32
    %51 = vector.broadcast %c2_i32 : i32 to vector<16x128xi32>
    %52 = arith.cmpi sge, %50, %51 : vector<16x128xi32>
    %c6_i32 = arith.constant 6 : i32
    %53 = vector.broadcast %c6_i32 : i32 to vector<16x128xi32>
    %54 = arith.cmpi slt, %50, %53 : vector<16x128xi32>
    %55 = arith.andi %52, %54 : vector<16x128xi1>
    %cst_28 = arith.constant -1.000000e+30 : f32
    %56 = vector.broadcast %cst_28 : f32 to vector<16x128xf32>
    %57 = arith.select %55, %49, %56 : vector<16x128xi1>, vector<16x128xf32>
    %cst_29 = arith.constant dense<0xFF800000> : vector<16xf32>
    %58 = vector.multi_reduction <maximumf>, %57, %cst_29 [1] : vector<16x128xf32> to vector<16xf32>
    %59 = vector.shape_cast %58 : vector<16xf32> to vector<16x1xf32>
    %60 = vector.broadcast %59 : vector<16x1xf32> to vector<16x128xf32>
    %61 = arith.subf %57, %60 : vector<16x128xf32>
    %62 = math.exp %61 : vector<16x128xf32>
    %cst_30 = arith.constant dense<0.000000e+00> : vector<16xf32>
    %63 = vector.multi_reduction <add>, %62, %cst_30 [1] : vector<16x128xf32> to vector<16xf32>
    %64 = vector.shape_cast %63 : vector<16xf32> to vector<16x1xf32>
    %65 = math.log %64 : vector<16x1xf32>
    %66 = arith.addf %65, %59 : vector<16x1xf32>
    %67 = vector.broadcast %66 : vector<16x1xf32> to vector<16x128xf32>
    %68 = arith.subf %57, %67 : vector<16x128xf32>
    %cst_31 = arith.constant 0.000000e+00 : f32
    %69 = vector.broadcast %cst_31 : f32 to vector<16x128xf32>
    %70 = arith.select %55, %68, %69 : vector<16x128xi1>, vector<16x128xf32>
    %c2_i32_32 = arith.constant 2 : i32
    %71 = vector.broadcast %c2_i32_32 : i32 to vector<16x128xi32>
    %72 = arith.cmpi slt, %50, %71 : vector<16x128xi32>
    %73 = arith.select %72, %38, %70 : vector<16x128xi1>, vector<16x128xf32>
    %c0_33 = arith.constant 0 : index
    %c0_34 = arith.constant 0 : index
    %74 = vector.load %arg5[%c0_33, %c0_34] : memref<16x128xf32, #tpu.memory_space<vmem>>, vector<16x128xf32>
    tpu.vector_store %arg5[%c0_33, %c0_34], %73 {strides = array<i32>} : memref<16x128xf32, #tpu.memory_space<vmem>>, vector<16x128xf32>,
    return
  }
  func.func @transform_0(%arg0: i32) -> (i32, i32, i32) {
    %c0_i32 = arith.constant 0 : i32
    %c0_i32_0 = arith.constant 0 : i32
    %c0_i32_1 = arith.constant 0 : i32
    return %arg0, %c0_i32, %c0_i32_0 : i32, i32, i32
  }
  func.func @transform_1(%arg0: i32) -> (i32, i32) {
    %c0_i32 = arith.constant 0 : i32
    %c0_i32_0 = arith.constant 0 : i32
    return %arg0, %c0_i32 : i32, i32
  }
  func.func @transform_2(%arg0: i32) -> (i32, i32, i32) {
    %c0_i32 = arith.constant 0 : i32
    %c0_i32_0 = arith.constant 0 : i32
    %c0_i32_1 = arith.constant 0 : i32
    %c0_i32_2 = arith.constant 0 : i32
    return %c0_i32, %c0_i32_0, %c0_i32_1 : i32, i32, i32
  }
  func.func @transform_3(%arg0: i32) -> (i32, i32) {
    %c0_i32 = arith.constant 0 : i32
    %c0_i32_0 = arith.constant 0 : i32
    %c0_i32_1 = arith.constant 0 : i32
    return %c0_i32, %c0_i32_0 : i32, i32
  }
  func.func @transform_4(%arg0: i32) -> (i32, i32) {
    %c0_i32 = arith.constant 0 : i32
    %c0_i32_0 = arith.constant 0 : i32
    return %arg0, %c0_i32 : i32, i32
  }
}

</mosaic_0001>

<llo_original>
// kernel: net_forward.1
$region0: #{net_forward.1}
  #allocation0 [shape = 'u32[]', space=smem, size = 0x4, offset = 0x4, fixed_abs, tag = 'smem constant byte address 0x4 - core index']
  #allocation1 [shape = 'u32[144,128]{1,0:T(1,128)}', space=vmem, size = 0x12000, scoped, tag = 'internal scratch']
  %s0 = inlined_call_operand.hbm [shape: bf16[4,8,8], index: 0, kind: input, shape index: {}]
  %s1 = inlined_call_operand.hbm [shape: f32[32,16], index: 1, kind: input, shape index: {}]
  %s2 = inlined_call_operand.hbm [shape: bf16[4,128,128], index: 2, kind: input, shape index: {}]
  %s3 = inlined_call_operand.vmem [shape: f32[8,128], index: 3, kind: input, shape index: {}]
  %s4 = inlined_call_operand.vmem [shape: f32[32,128], index: 4, kind: output, shape index: {}]
  %s5 = sld [smem:[#allocation0]]
  $region61: #{net_forward.1} parent=0
    _
  %s7 = ssub.s32 1, %s5
  %s8 = scalar_select 0, %s7, %s5
  $region1: #{net_forward.1} parent=0
    #allocation2 [shape = 'u8[8192]{0}', space=vmem, size = 0x2000, scoped, tag = 'input window, operand 0']
    #allocation3 [shape = 's32[2]{0}', space=sflag, size = 0x8, scoped, tag = 'scoped memory for net_forward.1']
    #allocation4 [shape = 'u8[16384]{0}', space=vmem, size = 0x4000, scoped, tag = 'input window, operand 1']
    #allocation5 [shape = 's32[2]{0}', space=sflag, size = 0x8, scoped, tag = 'scoped memory for net_forward.1']
    #allocation6 [shape = 'u8[131072]{0}', space=vmem, size = 0x20000, scoped, tag = 'input window, operand 2, single buffered']
    %9 = vsyncpa [#allocation3], 0
    %s10 = scalar_lea.sflag [#allocation3], 1
    %11 = vsyncpa %s10, 0
    %12 = vsyncpa [#allocation5], 0
    %s13 = scalar_lea.sflag [#allocation5], 1
    %14 = vsyncpa %s13, 0
    loop: start=0, step=1, limit=4
    $region2: #{net_forward.1} parent=1 // loop_pre_header
      _
    $region3: #{net_forward.1} parent=1 // loop_header
      %s16 = sphi 0, %s20
      %p17 = scmp.ge.s32.totalorder %s16, 4
      %s26 = sphi 0, %s28
      %s29 = sphi 0, %s26
      %s30 = sphi 0, %s29
      %s46 = sphi 0, %s30
      %s52 = sphi 0, %s54
      %s55 = sphi 0, %s52
      %s56 = sphi 0, %s55
      %s72 = sphi 0, %s56
      %s76 = sphi 0, %s76
      %s78 = sphi 0, %s76
      %s79 = sphi 0, %s78
      %s93 = sphi 0, %s79
      %s97 = sphi 0, %s97
      %s99 = sphi 0, %s97
      %s100 = sphi 0, %s99
      %s114 = sphi 0, %s100
      %s120 = sphi 0, %s122
      %s123 = sphi 0, %s120
      %s124 = sphi 0, %s123
      %s140 = sphi 0, %s124
    $region4: #{net_forward.1} parent=1 // loop_header_branch
      %19 = sbr.rel (%p17) target = $region8
    $region5: #{net_forward.1} parent=1 // loop_body
      %s21 = ssub.s32 %s16, 1
      %s22 = ssub.s32 %s16, 2
      %s23 = sadd.s32 %s16, 1
      %s24 = ssub.s32 %s16, %s23
      %p25 = scmp.eq.s32.totalorder %s24, 0
      %s27 = sadd.s32 %s26, 1
      %s28 = scalar_select %p25, %s26, %s27
      %p31 = pneg %p25
      %p32 = scmp.eq.s32.totalorder %s16, 1
      %p33 = por %p31, %p32
      %p34 = scmp.ne.s32.totalorder %s26, %s29
      %p35 = scmp.eq.s32.totalorder %s16, 0
      %p36 = por %p34, %p35
      %p37 = scmp.ne.s32.totalorder %s26, %s29
      %p38 = scmp.eq.s32.totalorder %s21, 1
      %p39 = por %p37, %p38
      %p40 = scmp.ne.s32.totalorder %s29, %s30
      %p41 = scmp.eq.s32.totalorder %s21, 0
      %p42 = por %p40, %p41
      %p43 = scmp.ne.s32.totalorder %s29, %s30
      %p44 = scmp.eq.s32.totalorder %s22, 1
      %p45 = por %p43, %p44
      %p47 = scmp.ne.s32.totalorder %s30, %s46
      %p48 = scmp.eq.s32.totalorder %s22, 0
      %p49 = por %p47, %p48
      %s50 = ssub.s32 %s16, %s23
      %p51 = scmp.eq.s32.totalorder %s50, 0
      %s53 = sadd.s32 %s52, 1
      %s54 = scalar_select %p51, %s52, %s53
      %p57 = pneg %p51
      %p58 = scmp.eq.s32.totalorder %s16, 1
      %p59 = por %p57, %p58
      %p60 = scmp.ne.s32.totalorder %s52, %s55
      %p61 = scmp.eq.s32.totalorder %s16, 0
      %p62 = por %p60, %p61
      %p63 = scmp.ne.s32.totalorder %s52, %s55
      %p64 = scmp.eq.s32.totalorder %s21, 1
      %p65 = por %p63, %p64
      %p66 = scmp.ne.s32.totalorder %s55, %s56
      %p67 = scmp.eq.s32.totalorder %s21, 0
      %p68 = por %p66, %p67
      %p69 = scmp.ne.s32.totalorder %s55, %s56
      %p70 = scmp.eq.s32.totalorder %s22, 1
      %p71 = por %p69, %p70
      %p73 = scmp.ne.s32.totalorder %s56, %s72
      %p74 = scmp.eq.s32.totalorder %s22, 0
      %p75 = por %p73, %p74
      %s77 = sadd.s32 %s76, 1
      %p80 = scmp.eq.s32.totalorder %s16, 1
      %p81 = scmp.ne.s32.totalorder %s76, %s78
      %p82 = scmp.eq.s32.totalorder %s16, 0
      %p83 = por %p81, %p82
      %p84 = scmp.ne.s32.totalorder %s76, %s78
      %p85 = scmp.eq.s32.totalorder %s21, 1
      %p86 = por %p84, %p85
      %p87 = scmp.ne.s32.totalorder %s78, %s79
      %p88 = scmp.eq.s32.totalorder %s21, 0
      %p89 = por %p87, %p88
      %p90 = scmp.ne.s32.totalorder %s78, %s79
      %p91 = scmp.eq.s32.totalorder %s22, 1
      %p92 = por %p90, %p91
      %p94 = scmp.ne.s32.totalorder %s79, %s93
      %p95 = scmp.eq.s32.totalorder %s22, 0
      %p96 = por %p94, %p95
      %s98 = sadd.s32 %s97, 1
      %p101 = scmp.eq.s32.totalorder %s16, 1
      %p102 = scmp.ne.s32.totalorder %s97, %s99
      %p103 = scmp.eq.s32.totalorder %s16, 0
      %p104 = por %p102, %p103
      %p105 = scmp.ne.s32.totalorder %s97, %s99
      %p106 = scmp.eq.s32.totalorder %s21, 1
      %p107 = por %p105, %p106
      %p108 = scmp.ne.s32.totalorder %s99, %s100
      %p109 = scmp.eq.s32.totalorder %s21, 0
      %p110 = por %p108, %p109
      %p111 = scmp.ne.s32.totalorder %s99, %s100
      %p112 = scmp.eq.s32.totalorder %s22, 1
      %p113 = por %p111, %p112
      %p115 = scmp.ne.s32.totalorder %s100, %s114
      %p116 = scmp.eq.s32.totalorder %s22, 0
      %p117 = por %p115, %p116
      %s118 = ssub.s32 %s16, %s23
      %p119 = scmp.eq.s32.totalorder %s118, 0
      %s121 = sadd.s32 %s120, 1
      %s122 = scalar_select %p119, %s120, %s121
      %p125 = pneg %p119
      %p126 = scmp.eq.s32.totalorder %s16, 1
      %p127 = por %p125, %p126
      %p128 = scmp.ne.s32.totalorder %s120, %s123
      %p129 = scmp.eq.s32.totalorder %s16, 0
      %p130 = por %p128, %p129
      %p131 = scmp.ne.s32.totalorder %s120, %s123
      %p132 = scmp.eq.s32.totalorder %s21, 1
      %p133 = por %p131, %p132
      %p134 = scmp.ne.s32.totalorder %s123, %s124
      %p135 = scmp.eq.s32.totalorder %s21, 0
      %p136 = por %p134, %p135
      %p137 = scmp.ne.s32.totalorder %s123, %s124
      %p138 = scmp.eq.s32.totalorder %s22, 1
      %p139 = por %p137, %p138
      %p141 = scmp.ne.s32.totalorder %s124, %s140
      %p142 = scmp.eq.s32.totalorder %s22, 0
      %p143 = por %p141, %p142
      %p144 = scmp.le.s32.totalorder 1, %s16
      %p145 = scmp.lt.s32.totalorder %s16, 3
      %p146 = pnand %p144, %p145
      %p147 = pneg %p146
      // Predicated region
      $region9: #{net_forward.1} parent=5 // pred_check
        _
      $region10: #{net_forward.1} parent=5 // pred_check_branch
        %149 = sbr.rel (%p146) target = $region12
      $region11: #{net_forward.1} parent=5 // pred_region
        %s150 = ssub.s32 %s16, 1
        // Predicated region
        $region13: #{net_forward.1} parent=11 // pred_check
          %p151 = pneg %p89
        $region14: #{net_forward.1} parent=11 // pred_check_branch
          %153 = sbr.rel (%p151) target = $region16
        $region15: #{net_forward.1} parent=11 // pred_region
          %s155 = ssub.s32 4096, 4096
          %156 = vsyncadd [#allocation5], %s155
          %s157 = sshll.u32 [#allocation6], 4
          %s158 = int_to_ptr.vmem [resolvable:$true] %s157
          %163 = dma.hbm_to_vmem [thread:$0]  %s2, 4096, %s158, [#allocation5], 64, 64, 4
        $region16: #{net_forward.1} parent=11 // pred_fallthru
          _
        // Predicated region
        $region17: #{net_forward.1} parent=11 // pred_check
          %p164 = pneg %p110
        $region18: #{net_forward.1} parent=11 // pred_check_branch
          %166 = sbr.rel (%p164) target = $region20
        $region19: #{net_forward.1} parent=11 // pred_region
          _
        $region20: #{net_forward.1} parent=11 // pred_fallthru
          _
      $region12: #{net_forward.1} parent=5 // pred_fallthru
        _
      %p167 = scmp.lt.s32.totalorder %s16, 2
      // Predicated region
      $region21: #{net_forward.1} parent=5 // pred_check
        %p168 = pneg %p167
      $region22: #{net_forward.1} parent=5 // pred_check_branch
        %170 = sbr.rel (%p168) target = $region24
      $region23: #{net_forward.1} parent=5 // pred_region
        // Predicated region
        $region25: #{net_forward.1} parent=23 // pred_check
          %p171 = pneg %p36
        $region26: #{net_forward.1} parent=23 // pred_check_branch
          %173 = sbr.rel (%p171) target = $region28
        $region27: #{net_forward.1} parent=23 // pred_region
          %s174 = sand.u32 %s26, 1
          %s175 = scalar_lea.sflag [#allocation3], %s174
          %s176 = sand.u32 %s26, 1
          %s177 = smul.addr %s176, 8
          %s178 = scalar_lea.vmem [#allocation2], %s177
          %s179 = smul.u32 2, %s16
          %s181 = ssub.s32 128, 128
          %182 = vsyncadd %s175, %s181
          %s183 = smul.addr %s179, 64
          %s184 = scalar_lea.hbm %s0, %s183
          %s185 = sshll.u32 %s178, 4
          %s186 = int_to_ptr.vmem [resolvable:$true] %s185
          %191 = dma.hbm_to_vmem [thread:$0]  %s184, 128, %s186, %s175, 64, 64, 4
        $region28: #{net_forward.1} parent=23 // pred_fallthru
          _
        // Predicated region
        $region29: #{net_forward.1} parent=23 // pred_check
          %p192 = pneg %p62
        $region30: #{net_forward.1} parent=23 // pred_check_branch
          %194 = sbr.rel (%p192) target = $region32
        $region31: #{net_forward.1} parent=23 // pred_region
          %s195 = sand.u32 %s16, 1
          %s196 = scalar_lea.sflag [#allocation5], %s195
          %s197 = sand.u32 %s52, 1
          %s198 = smul.addr %s197, 16
          %s199 = scalar_lea.vmem [#allocation4], %s198
          %s200 = smul.u32 2, %s16
          %s202 = ssub.s32 256, 256
          %203 = vsyncadd %s196, %s202
          %s204 = smul.addr %s200, 128
          %s205 = scalar_lea.hbm %s1, %s204
          %s206 = sshll.u32 %s199, 4
          %s207 = int_to_ptr.vmem [resolvable:$true] %s206
          %212 = dma.hbm_to_vmem [thread:$0]  %s205, 256, %s207, %s196, 128, 128, 8
        $region32: #{net_forward.1} parent=23 // pred_fallthru
          _
      $region24: #{net_forward.1} parent=5 // pred_fallthru
        _
      %p213 = scmp.le.s32.totalorder 1, %s16
      %p214 = scmp.lt.s32.totalorder %s16, 3
      %p215 = pnand %p213, %p214
      %p216 = pneg %p215
      // Predicated region
      $region33: #{net_forward.1} parent=5 // pred_check
        _
      $region34: #{net_forward.1} parent=5 // pred_check_branch
        %218 = sbr.rel (%p215) target = $region36
      $region35: #{net_forward.1} parent=5 // pred_region
        %s219 = ssub.s32 %s16, 1
        %s220 = sand.u32 %s29, 1
        %s221 = scalar_lea.sflag [#allocation3], %s220
        %s222 = sand.u32 %s29, 1
        %s223 = smul.addr %s222, 8
        %s224 = scalar_lea.vmem [#allocation2], %s223
        // Predicated region
        $region37: #{net_forward.1} parent=35 // pred_check
          %p225 = pneg %p42
        $region38: #{net_forward.1} parent=35 // pred_check_branch
          %227 = sbr.rel (%p225) target = $region40
        $region39: #{net_forward.1} parent=35 // pred_region
          %228 = dma.done %s221, 128
        $region40: #{net_forward.1} parent=35 // pred_fallthru
          _
        %s229 = sand.u32 %s21, 1
        %s230 = scalar_lea.sflag [#allocation5], %s229
        %s231 = sand.u32 %s55, 1
        %s232 = smul.addr %s231, 16
        %s233 = scalar_lea.vmem [#allocation4], %s232
        // Predicated region
        $region41: #{net_forward.1} parent=35 // pred_check
          %p234 = pneg %p68
        $region42: #{net_forward.1} parent=35 // pred_check_branch
          %236 = sbr.rel (%p234) target = $region44
        $region43: #{net_forward.1} parent=35 // pred_region
          %237 = dma.done %s230, 256
        $region44: #{net_forward.1} parent=35 // pred_fallthru
          _
        // Predicated region
        $region45: #{net_forward.1} parent=35 // pred_check
          %p238 = pneg %p89
        $region46: #{net_forward.1} parent=35 // pred_check_branch
          %240 = sbr.rel (%p238) target = $region48
        $region47: #{net_forward.1} parent=35 // pred_region
          %241 = dma.done [#allocation5], 4096
        $region48: #{net_forward.1} parent=35 // pred_fallthru
          _
        %s242 = sand.u32 %s29, 1
        %s243 = scalar_lea.sflag [#allocation3], %s242
        %s244 = sand.u32 %s29, 1
        %s245 = smul.addr %s244, 8
        %s246 = scalar_lea.vmem [#allocation2], %s245
        %p247 = pneg %p42
        %p248 = pneg %p39
        %s249 = sand.u32 %s21, 1
        %s250 = scalar_lea.sflag [#allocation5], %s249
        %s251 = sand.u32 %s55, 1
        %s252 = smul.addr %s251, 16
        %s253 = scalar_lea.vmem [#allocation4], %s252
        %p254 = pneg %p68
        %p255 = pneg %p65
        %p256 = pneg %p89
        %p257 = pneg %p86
        %p258 = pneg %p110
        %p259 = pneg %p107
        %p260 = pneg %p136
        %p261 = pneg %p133
        %s262 = smul.u32 2, %s21
        %p263 = scmp.lt.s32.totalorder %s262, 3
        %s264 = scalar_select %p263, %s262, 3
        %s265 = smul.addr %s264, 8
        %s266 = scalar_lea.vmem %s4, %s265
        %s267 = smul.u32 2, %s21
        %s268 = smul.u32 2, %s21
        %s269 = smul.u32 2, %s21
        %p270 = scmp.lt.s32.totalorder %s269, 3
        %s271 = scalar_select %p270, %s269, 3
        %s272 = smul.addr %s271, 8
        %s273 = scalar_lea.vmem %s4, %s272
        %s274 = smul.u32 2, %s21
        %v276 = vld [vmem:[%s224] sm:$0xf]
        %v277 = vld [vmem:[%s224 + $0x4] sm:$0xf]
        %v278 = vld [vmem:[%s233] sm:$0xff]
        %v279 = vld [vmem:[%s233 + $0x8] sm:$0xff]
        %v280 = vld [vmem:[#allocation6] sm:$0xf]
        %v281 = vld [vmem:[#allocation6 + $0x4] sm:$0xf]
        %v282 = vpack.c.bf16 %v279, %v278
        %v285 = vunpack.c.l.b16 %v280
        %v286 = vunpack.c.l.b16 %v281
        %v287 = vpack.c.b16 %v286, %v285
        %vm289 = vcmask 130048
        %v291 = vsel %vm289, %v282, 0
        %293 = vmatprep.subr.bf16.mxu0 0
        %294 = vmatpush1.bf16.msra.mxu0 %v287
        %295 = vmatprep.subr.bf16.mxu0 0
        %296 = vmatpush1.bf16.msra.mxu0 0
        %297 = vmatprep.subr.bf16.mxu0 0
        %298 = vmatpush1.bf16.msra.mxu0 0
        %299 = vmatprep.subr.bf16.mxu0 0
        %300 = vmatpush1.bf16.msra.mxu0 0
        %301 = vmatprep.subr.bf16.mxu0 0
        %302 = vmatpush1.bf16.msra.mxu0 0
        %303 = vmatprep.subr.bf16.mxu0 0
        %304 = vmatpush1.bf16.msra.mxu0 0
        %305 = vmatprep.subr.bf16.mxu0 0
        %306 = vmatpush1.bf16.msra.mxu0 0
        %307 = vmatprep.subr.bf16.mxu0 0
        %308 = vmatpush1.bf16.msra.mxu0 0
        %309 = vmatprep.subr.bf16.mxu0 0
        %310 = vmatpush1.bf16.msra.mxu0 0
        %311 = vmatprep.subr.bf16.mxu0 0
        %312 = vmatpush1.bf16.msra.mxu0 0
        %313 = vmatprep.subr.bf16.mxu0 0
        %314 = vmatpush1.bf16.msra.mxu0 0
        %315 = vmatprep.subr.bf16.mxu0 0
        %316 = vmatpush1.bf16.msra.mxu0 0
        %317 = vmatprep.subr.bf16.mxu0 0
        %318 = vmatpush1.bf16.msra.mxu0 0
        %319 = vmatprep.subr.bf16.mxu0 0
        %320 = vmatpush1.bf16.msra.mxu0 0
        %321 = vmatprep.subr.bf16.mxu0 0
        %322 = vmatpush1.bf16.msra.mxu0 0
        %323 = vmatprep.subr.bf16.mxu0 0
        %324 = vmatpush1.bf16.msra.mxu0 0
        %325 = vmatprep.mubr.bf16.mxu0 0
        %326 = vmatmul.mubr.bf16.gmra.mrb[0].mxu0 %v291
        %v327 = vpop.f32.mrb[0].mxu0
        %v328 = vadd.f32 0.0, %v327
        %v329 = vpop.f32.mrb[0].mxu0
        %v330 = vpop.f32.mrb[0].mxu0
        %v331 = vadd.f32 0.0, %v330
        %v332 = vpop.f32.mrb[0].mxu0
        %333 = vdwg.mxu0
        %v334 = vpack.c.bf16 %v328, %v328
        %v335 = vpack.c.bf16 %v331, %v331
        %vm336 = vcmask 64512
        %v338 = vsel %vm336, %v276, 0
        %vm340 = vcmask 1043456
        %v342 = vsel %vm340, %v334, 0
        %344 = vmatprep.subr.bf16.mxu0 0
        %345 = vmatpush1.bf16.msra.mxu0 %v342
        %346 = vmatprep.subr.bf16.mxu0 0
        %347 = vmatpush1.bf16.msra.mxu0 0
        %348 = vmatprep.subr.bf16.mxu0 0
        %349 = vmatpush1.bf16.msra.mxu0 0
        %350 = vmatprep.subr.bf16.mxu0 0
        %351 = vmatpush1.bf16.msra.mxu0 0
        %352 = vmatprep.subr.bf16.mxu0 0
        %353 = vmatpush1.bf16.msra.mxu0 0
        %354 = vmatprep.subr.bf16.mxu0 0
        %355 = vmatpush1.bf16.msra.mxu0 0
        %356 = vmatprep.subr.bf16.mxu0 0
        %357 = vmatpush1.bf16.msra.mxu0 0
        %358 = vmatprep.subr.bf16.mxu0 0
        %359 = vmatpush1.bf16.msra.mxu0 0
        %360 = vmatprep.subr.bf16.mxu0 0
        %361 = vmatpush1.bf16.msra.mxu0 0
        %362 = vmatprep.subr.bf16.mxu0 0
        %363 = vmatpush1.bf16.msra.mxu0 0
        %364 = vmatprep.subr.bf16.mxu0 0
        %365 = vmatpush1.bf16.msra.mxu0 0
        %366 = vmatprep.subr.bf16.mxu0 0
        %367 = vmatpush1.bf16.msra.mxu0 0
        %368 = vmatprep.subr.bf16.mxu0 0
        %369 = vmatpush1.bf16.msra.mxu0 0
        %370 = vmatprep.subr.bf16.mxu0 0
        %371 = vmatpush1.bf16.msra.mxu0 0
        %372 = vmatprep.subr.bf16.mxu0 0
        %373 = vmatpush1.bf16.msra.mxu0 0
        %374 = vmatprep.subr.bf16.mxu0 0
        %375 = vmatpush1.bf16.msra.mxu0 0
        %376 = vmatprep.mubr.bf16.mxu0 0
        %377 = vmatmul.mubr.bf16.gmra.mrb[0].mxu0 %v338
        %v378 = vpop.f32.mrb[0].mxu0
        %v379 = vadd.f32 0.0, %v378
        %v380 = vpop.f32.mrb[0].mxu0
        %v381 = vpop.f32.mrb[0].mxu0
        %v382 = vpop.f32.mrb[0].mxu0
        %383 = vdwg.mxu0
        %v385 = vsel %vm336, %v277, 0
        %v388 = vsel %vm340, %v335, 0
        %390 = vmatprep.subr.bf16.mxu0 0
        %391 = vmatpush1.bf16.msra.mxu0 %v388
        %392 = vmatprep.subr.bf16.mxu0 0
        %393 = vmatpush1.bf16.msra.mxu0 0
        %394 = vmatprep.subr.bf16.mxu0 0
        %395 = vmatpush1.bf16.msra.mxu0 0
        %396 = vmatprep.subr.bf16.mxu0 0
        %397 = vmatpush1.bf16.msra.mxu0 0
        %398 = vmatprep.subr.bf16.mxu0 0
        %399 = vmatpush1.bf16.msra.mxu0 0
        %400 = vmatprep.subr.bf16.mxu0 0
        %401 = vmatpush1.bf16.msra.mxu0 0
        %402 = vmatprep.subr.bf16.mxu0 0
        %403 = vmatpush1.bf16.msra.mxu0 0
        %404 = vmatprep.subr.bf16.mxu0 0
        %405 = vmatpush1.bf16.msra.mxu0 0
        %406 = vmatprep.subr.bf16.mxu0 0
        %407 = vmatpush1.bf16.msra.mxu0 0
        %408 = vmatprep.subr.bf16.mxu0 0
        %409 = vmatpush1.bf16.msra.mxu0 0
        %410 = vmatprep.subr.bf16.mxu0 0
        %411 = vmatpush1.bf16.msra.mxu0 0
        %412 = vmatprep.subr.bf16.mxu0 0
        %413 = vmatpush1.bf16.msra.mxu0 0
        %414 = vmatprep.subr.bf16.mxu0 0
        %415 = vmatpush1.bf16.msra.mxu0 0
        %416 = vmatprep.subr.bf16.mxu0 0
        %417 = vmatpush1.bf16.msra.mxu0 0
        %418 = vmatprep.subr.bf16.mxu0 0
        %419 = vmatpush1.bf16.msra.mxu0 0
        %420 = vmatprep.subr.bf16.mxu0 0
        %421 = vmatpush1.bf16.msra.mxu0 0
        %422 = vmatprep.mubr.bf16.mxu0 0
        %423 = vmatmul.mubr.bf16.gmra.mrb[0].mxu0 %v385
        %v424 = vpop.f32.mrb[0].mxu0
        %v425 = vadd.f32 0.0, %v424
        %v426 = vpop.f32.mrb[0].mxu0
        %v427 = vpop.f32.mrb[0].mxu0
        %v428 = vpop.f32.mrb[0].mxu0
        %429 = vdwg.mxu0
        %v430 = vld [vmem:[%s3] sm:$0x1]
        %v431 = vlaneseq
        %v432 = vshrl.u32 %v431, 7
        %v433 = vsub.s32 0, %v432
        %v434 = vrot.slane %v430, %v433
        %v435 = vadd.f32 %v379, %v434
        %v436 = vadd.f32 %v425, %v434
        %v437 = vtanh.pop %v435
        %v438 = vtanh.pop %v436
        %v439 = vpack.c.bf16 %v438, %v437
        %s440 = scalar_lea.vmem [#allocation6], 64
        %v441 = vld [vmem:[%s440] sm:$0xf]
        %v442 = vld [vmem:[%s440 + $0x4] sm:$0xf]
        %v443 = vld [vmem:[%s440 + $0x8] sm:$0xf]
        %v444 = vld [vmem:[%s440 + $0xc] sm:$0xf]
        %v445 = vld [vmem:[%s440 + $0x10] sm:$0xf]
        %v446 = vld [vmem:[%s440 + $0x14] sm:$0xf]
        %v447 = vld [vmem:[%s440 + $0x18] sm:$0xf]
        %v448 = vld [vmem:[%s440 + $0x1c] sm:$0xf]
        %v449 = vld [vmem:[%s440 + $0x20] sm:$0xf]
        %v450 = vld [vmem:[%s440 + $0x24] sm:$0xf]
        %v451 = vld [vmem:[%s440 + $0x28] sm:$0xf]
        %v452 = vld [vmem:[%s440 + $0x2c] sm:$0xf]
        %v453 = vld [vmem:[%s440 + $0x30] sm:$0xf]
        %v454 = vld [vmem:[%s440 + $0x34] sm:$0xf]
        %v455 = vld [vmem:[%s440 + $0x38] sm:$0xf]
        %v456 = vld [vmem:[%s440 + $0x3c] sm:$0xf]
        %v473 = vunpack.c.l.b16 %v441
        %v474 = vunpack.c.l.b16 %v442
        %v475 = vunpack.c.l.b16 %v443
        %v476 = vunpack.c.l.b16 %v444
        %v477 = vunpack.c.l.b16 %v445
        %v478 = vunpack.c.l.b16 %v446
        %v479 = vunpack.c.l.b16 %v447
        %v480 = vunpack.c.l.b16 %v448
        %v481 = vunpack.c.l.b16 %v449
        %v482 = vunpack.c.l.b16 %v450
        %v483 = vunpack.c.l.b16 %v451
        %v484 = vunpack.c.l.b16 %v452
        %v485 = vunpack.c.l.b16 %v453
        %v486 = vunpack.c.l.b16 %v454
        %v487 = vunpack.c.l.b16 %v455
        %v488 = vunpack.c.l.b16 %v456
        %v489 = vpack.c.b16 %v474, %v473
        %v490 = vpack.c.b16 %v476, %v475
        %v491 = vpack.c.b16 %v478, %v477
        %v492 = vpack.c.b16 %v480, %v479
        %v493 = vpack.c.b16 %v482, %v481
        %v494 = vpack.c.b16 %v484, %v483
        %v495 = vpack.c.b16 %v486, %v485
        %v496 = vpack.c.b16 %v488, %v487
        %505 = vmatprep.subr.bf16.mxu0 0
        %506 = vmatpush1.bf16.msra.mxu0 %v489
        %507 = vmatprep.subr.bf16.mxu0 0
        %508 = vmatpush1.bf16.msra.mxu0 %v490
        %509 = vmatprep.subr.bf16.mxu0 0
        %510 = vmatpush1.bf16.msra.mxu0 %v491
        %511 = vmatprep.subr.bf16.mxu0 0
        %512 = vmatpush1.bf16.msra.mxu0 %v492
        %513 = vmatprep.subr.bf16.mxu0 0
        %514 = vmatpush1.bf16.msra.mxu0 %v493
        %515 = vmatprep.subr.bf16.mxu0 0
        %516 = vmatpush1.bf16.msra.mxu0 %v494
        %517 = vmatprep.subr.bf16.mxu0 0
        %518 = vmatpush1.bf16.msra.mxu0 %v495
        %519 = vmatprep.subr.bf16.mxu0 0
        %520 = vmatpush1.bf16.msra.mxu0 %v496
        %521 = vmatprep.subr.bf16.mxu0 0
        %522 = vmatpush1.bf16.msra.mxu0 0
        %523 = vmatprep.subr.bf16.mxu0 0
        %524 = vmatpush1.bf16.msra.mxu0 0
        %525 = vmatprep.subr.bf16.mxu0 0
        %526 = vmatpush1.bf16.msra.mxu0 0
        %527 = vmatprep.subr.bf16.mxu0 0
        %528 = vmatpush1.bf16.msra.mxu0 0
        %529 = vmatprep.subr.bf16.mxu0 0
        %530 = vmatpush1.bf16.msra.mxu0 0
        %531 = vmatprep.subr.bf16.mxu0 0
        %532 = vmatpush1.bf16.msra.mxu0 0
        %533 = vmatprep.subr.bf16.mxu0 0
        %534 = vmatpush1.bf16.msra.mxu0 0
        %535 = vmatprep.subr.bf16.mxu0 0
        %536 = vmatpush1.bf16.msra.mxu0 0
        %537 = vmatprep.mubr.bf16.mxu0 0
        %538 = vmatmul.mubr.bf16.gmra.mrb[0].mxu0 %v439
        %v539 = vpop.f32.mrb[0].mxu0
        %v540 = vadd.f32 0.0, %v539
        %v541 = vpop.f32.mrb[0].mxu0
        %v542 = vpop.f32.mrb[0].mxu0
        %v543 = vadd.f32 0.0, %v542
        %v544 = vpop.f32.mrb[0].mxu0
        %545 = vdwg.mxu0
        %v546 = vpack.c.bf16 %v540, %v540
        %v547 = vpack.c.bf16 %v543, %v543
        %v549 = vsel %vm340, %v546, 0
        %551 = vmatprep.subr.bf16.mxu0 0
        %552 = vmatpush1.bf16.msra.mxu0 %v549
        %553 = vmatprep.subr.bf16.mxu0 0
        %554 = vmatpush1.bf16.msra.mxu0 0
        %555 = vmatprep.subr.bf16.mxu0 0
        %556 = vmatpush1.bf16.msra.mxu0 0
        %557 = vmatprep.subr.bf16.mxu0 0
        %558 = vmatpush1.bf16.msra.mxu0 0
        %559 = vmatprep.subr.bf16.mxu0 0
        %560 = vmatpush1.bf16.msra.mxu0 0
        %561 = vmatprep.subr.bf16.mxu0 0
        %562 = vmatpush1.bf16.msra.mxu0 0
        %563 = vmatprep.subr.bf16.mxu0 0
        %564 = vmatpush1.bf16.msra.mxu0 0
        %565 = vmatprep.subr.bf16.mxu0 0
        %566 = vmatpush1.bf16.msra.mxu0 0
        %567 = vmatprep.subr.bf16.mxu0 0
        %568 = vmatpush1.bf16.msra.mxu0 0
        %569 = vmatprep.subr.bf16.mxu0 0
        %570 = vmatpush1.bf16.msra.mxu0 0
        %571 = vmatprep.subr.bf16.mxu0 0
        %572 = vmatpush1.bf16.msra.mxu0 0
        %573 = vmatprep.subr.bf16.mxu0 0
        %574 = vmatpush1.bf16.msra.mxu0 0
        %575 = vmatprep.subr.bf16.mxu0 0
        %576 = vmatpush1.bf16.msra.mxu0 0
        %577 = vmatprep.subr.bf16.mxu0 0
        %578 = vmatpush1.bf16.msra.mxu0 0
        %579 = vmatprep.subr.bf16.mxu0 0
        %580 = vmatpush1.bf16.msra.mxu0 0
        %581 = vmatprep.subr.bf16.mxu0 0
        %582 = vmatpush1.bf16.msra.mxu0 0
        %583 = vmatprep.mubr.bf16.mxu0 0
        %584 = vmatmul.mubr.bf16.gmra.mrb[0].mxu0 %v338
        %v585 = vpop.f32.mrb[0].mxu0
        %v586 = vadd.f32 0.0, %v585
        %v587 = vpop.f32.mrb[0].mxu0
        %v588 = vpop.f32.mrb[0].mxu0
        %v589 = vpop.f32.mrb[0].mxu0
        %590 = vdwg.mxu0
        %v592 = vsel %vm340, %v547, 0
        %594 = vmatprep.subr.bf16.mxu0 0
        %595 = vmatpush1.bf16.msra.mxu0 %v592
        %596 = vmatprep.subr.bf16.mxu0 0
        %597 = vmatpush1.bf16.msra.mxu0 0
        %598 = vmatprep.subr.bf16.mxu0 0
        %599 = vmatpush1.bf16.msra.mxu0 0
        %600 = vmatprep.subr.bf16.mxu0 0
        %601 = vmatpush1.bf16.msra.mxu0 0
        %602 = vmatprep.subr.bf16.mxu0 0
        %603 = vmatpush1.bf16.msra.mxu0 0
        %604 = vmatprep.subr.bf16.mxu0 0
        %605 = vmatpush1.bf16.msra.mxu0 0
        %606 = vmatprep.subr.bf16.mxu0 0
        %607 = vmatpush1.bf16.msra.mxu0 0
        %608 = vmatprep.subr.bf16.mxu0 0
        %609 = vmatpush1.bf16.msra.mxu0 0
        %610 = vmatprep.subr.bf16.mxu0 0
        %611 = vmatpush1.bf16.msra.mxu0 0
        %612 = vmatprep.subr.bf16.mxu0 0
        %613 = vmatpush1.bf16.msra.mxu0 0
        %614 = vmatprep.subr.bf16.mxu0 0
        %615 = vmatpush1.bf16.msra.mxu0 0
        %616 = vmatprep.subr.bf16.mxu0 0
        %617 = vmatpush1.bf16.msra.mxu0 0
        %618 = vmatprep.subr.bf16.mxu0 0
        %619 = vmatpush1.bf16.msra.mxu0 0
        %620 = vmatprep.subr.bf16.mxu0 0
        %621 = vmatpush1.bf16.msra.mxu0 0
        %622 = vmatprep.subr.bf16.mxu0 0
        %623 = vmatpush1.bf16.msra.mxu0 0
        %624 = vmatprep.subr.bf16.mxu0 0
        %625 = vmatpush1.bf16.msra.mxu0 0
        %626 = vmatprep.mubr.bf16.mxu0 0
        %627 = vmatmul.mubr.bf16.gmra.mrb[0].mxu0 %v385
        %v628 = vpop.f32.mrb[0].mxu0
        %v629 = vadd.f32 0.0, %v628
        %v630 = vpop.f32.mrb[0].mxu0
        %v631 = vpop.f32.mrb[0].mxu0
        %v632 = vpop.f32.mrb[0].mxu0
        %633 = vdwg.mxu0
        %v634 = vld [vmem:[%s3 + $0x1] sm:$0x1]
        %v635 = vlaneseq
        %v636 = vshrl.u32 %v635, 7
        %v637 = vsub.s32 0, %v636
        %v638 = vrot.slane %v634, %v637
        %v639 = vadd.f32 %v586, %v638
        %v640 = vadd.f32 %v629, %v638
        %v641 = vtanh.pop %v639
        %v642 = vtanh.pop %v640
        %v643 = vpack.c.bf16 %v642, %v641
        %s644 = scalar_lea.vmem [#allocation6], 128
        %v645 = vld [vmem:[%s644] sm:$0xf]
        %v646 = vld [vmem:[%s644 + $0x4] sm:$0xf]
        %v647 = vld [vmem:[%s644 + $0x8] sm:$0xf]
        %v648 = vld [vmem:[%s644 + $0xc] sm:$0xf]
        %v649 = vld [vmem:[%s644 + $0x10] sm:$0xf]
        %v650 = vld [vmem:[%s644 + $0x14] sm:$0xf]
        %v651 = vld [vmem:[%s644 + $0x18] sm:$0xf]
        %v652 = vld [vmem:[%s644 + $0x1c] sm:$0xf]
        %v653 = vld [vmem:[%s644 + $0x20] sm:$0xf]
        %v654 = vld [vmem:[%s644 + $0x24] sm:$0xf]
        %v655 = vld [vmem:[%s644 + $0x28] sm:$0xf]
        %v656 = vld [vmem:[%s644 + $0x2c] sm:$0xf]
        %v657 = vld [vmem:[%s644 + $0x30] sm:$0xf]
        %v658 = vld [vmem:[%s644 + $0x34] sm:$0xf]
        %v659 = vld [vmem:[%s644 + $0x38] sm:$0xf]
        %v660 = vld [vmem:[%s644 + $0x3c] sm:$0xf]
        %v677 = vunpack.c.l.b16 %v645
        %v678 = vunpack.c.l.b16 %v646
        %v679 = vunpack.c.l.b16 %v647
        %v680 = vunpack.c.l.b16 %v648
        %v681 = vunpack.c.l.b16 %v649
        %v682 = vunpack.c.l.b16 %v650
        %v683 = vunpack.c.l.b16 %v651
        %v684 = vunpack.c.l.b16 %v652
        %v685 = vunpack.c.l.b16 %v653
        %v686 = vunpack.c.l.b16 %v654
        %v687 = vunpack.c.l.b16 %v655
        %v688 = vunpack.c.l.b16 %v656
        %v689 = vunpack.c.l.b16 %v657
        %v690 = vunpack.c.l.b16 %v658
        %v691 = vunpack.c.l.b16 %v659
        %v692 = vunpack.c.l.b16 %v660
        %v693 = vpack.c.b16 %v678, %v677
        %v694 = vpack.c.b16 %v680, %v679
        %v695 = vpack.c.b16 %v682, %v681
        %v696 = vpack.c.b16 %v684, %v683
        %v697 = vpack.c.b16 %v686, %v685
        %v698 = vpack.c.b16 %v688, %v687
        %v699 = vpack.c.b16 %v690, %v689
        %v700 = vpack.c.b16 %v692, %v691
        %709 = vmatprep.subr.bf16.mxu0 0
        %710 = vmatpush1.bf16.msra.mxu0 %v693
        %711 = vmatprep.subr.bf16.mxu0 0
        %712 = vmatpush1.bf16.msra.mxu0 %v694
        %713 = vmatprep.subr.bf16.mxu0 0
        %714 = vmatpush1.bf16.msra.mxu0 %v695
        %715 = vmatprep.subr.bf16.mxu0 0
        %716 = vmatpush1.bf16.msra.mxu0 %v696
        %717 = vmatprep.subr.bf16.mxu0 0
        %718 = vmatpush1.bf16.msra.mxu0 %v697
        %719 = vmatprep.subr.bf16.mxu0 0
        %720 = vmatpush1.bf16.msra.mxu0 %v698
        %721 = vmatprep.subr.bf16.mxu0 0
        %722 = vmatpush1.bf16.msra.mxu0 %v699
        %723 = vmatprep.subr.bf16.mxu0 0
        %724 = vmatpush1.bf16.msra.mxu0 %v700
        %725 = vmatprep.subr.bf16.mxu0 0
        %726 = vmatpush1.bf16.msra.mxu0 0
        %727 = vmatprep.subr.bf16.mxu0 0
        %728 = vmatpush1.bf16.msra.mxu0 0
        %729 = vmatprep.subr.bf16.mxu0 0
        %730 = vmatpush1.bf16.msra.mxu0 0
        %731 = vmatprep.subr.bf16.mxu0 0
        %732 = vmatpush1.bf16.msra.mxu0 0
        %733 = vmatprep.subr.bf16.mxu0 0
        %734 = vmatpush1.bf16.msra.mxu0 0
        %735 = vmatprep.subr.bf16.mxu0 0
        %736 = vmatpush1.bf16.msra.mxu0 0
        %737 = vmatprep.subr.bf16.mxu0 0
        %738 = vmatpush1.bf16.msra.mxu0 0
        %739 = vmatprep.subr.bf16.mxu0 0
        %740 = vmatpush1.bf16.msra.mxu0 0
        %741 = vmatprep.mubr.bf16.mxu0 0
        %742 = vmatmul.mubr.bf16.gmra.mrb[0].mxu0 %v643
        %v743 = vpop.f32.mrb[0].mxu0
        %v744 = vadd.f32 0.0, %v743
        %v745 = vpop.f32.mrb[0].mxu0
        %v746 = vpop.f32.mrb[0].mxu0
        %v747 = vadd.f32 0.0, %v746
        %v748 = vpop.f32.mrb[0].mxu0
        %749 = vdwg.mxu0
        %v750 = vpack.c.bf16 %v744, %v744
        %v751 = vpack.c.bf16 %v747, %v747
        %v753 = vsel %vm340, %v750, 0
        %755 = vmatprep.subr.bf16.mxu0 0
        %756 = vmatpush1.bf16.msra.mxu0 %v753
        %757 = vmatprep.subr.bf16.mxu0 0
        %758 = vmatpush1.bf16.msra.mxu0 0
        %759 = vmatprep.subr.bf16.mxu0 0
        %760 = vmatpush1.bf16.msra.mxu0 0
        %761 = vmatprep.subr.bf16.mxu0 0
        %762 = vmatpush1.bf16.msra.mxu0 0
        %763 = vmatprep.subr.bf16.mxu0 0
        %764 = vmatpush1.bf16.msra.mxu0 0
        %765 = vmatprep.subr.bf16.mxu0 0
        %766 = vmatpush1.bf16.msra.mxu0 0
        %767 = vmatprep.subr.bf16.mxu0 0
        %768 = vmatpush1.bf16.msra.mxu0 0
        %769 = vmatprep.subr.bf16.mxu0 0
        %770 = vmatpush1.bf16.msra.mxu0 0
        %771 = vmatprep.subr.bf16.mxu0 0
        %772 = vmatpush1.bf16.msra.mxu0 0
        %773 = vmatprep.subr.bf16.mxu0 0
        %774 = vmatpush1.bf16.msra.mxu0 0
        %775 = vmatprep.subr.bf16.mxu0 0
        %776 = vmatpush1.bf16.msra.mxu0 0
        %777 = vmatprep.subr.bf16.mxu0 0
        %778 = vmatpush1.bf16.msra.mxu0 0
        %779 = vmatprep.subr.bf16.mxu0 0
        %780 = vmatpush1.bf16.msra.mxu0 0
        %781 = vmatprep.subr.bf16.mxu0 0
        %782 = vmatpush1.bf16.msra.mxu0 0
        %783 = vmatprep.subr.bf16.mxu0 0
        %784 = vmatpush1.bf16.msra.mxu0 0
        %785 = vmatprep.subr.bf16.mxu0 0
        %786 = vmatpush1.bf16.msra.mxu0 0
        %787 = vmatprep.mubr.bf16.mxu0 0
        %788 = vmatmul.mubr.bf16.gmra.mrb[0].mxu0 %v338
        %v789 = vpop.f32.mrb[0].mxu0
        %v790 = vadd.f32 0.0, %v789
        %v791 = vpop.f32.mrb[0].mxu0
        %v792 = vpop.f32.mrb[0].mxu0
        %v793 = vpop.f32.mrb[0].mxu0
        %794 = vdwg.mxu0
        %v796 = vsel %vm340, %v751, 0
        %798 = vmatprep.subr.bf16.mxu0 0
        %799 = vmatpush1.bf16.msra.mxu0 %v796
        %800 = vmatprep.subr.bf16.mxu0 0
        %801 = vmatpush1.bf16.msra.mxu0 0
        %802 = vmatprep.subr.bf16.mxu0 0
        %803 = vmatpush1.bf16.msra.mxu0 0
        %804 = vmatprep.subr.bf16.mxu0 0
        %805 = vmatpush1.bf16.msra.mxu0 0
        %806 = vmatprep.subr.bf16.mxu0 0
        %807 = vmatpush1.bf16.msra.mxu0 0
        %808 = vmatprep.subr.bf16.mxu0 0
        %809 = vmatpush1.bf16.msra.mxu0 0
        %810 = vmatprep.subr.bf16.mxu0 0
        %811 = vmatpush1.bf16.msra.mxu0 0
        %812 = vmatprep.subr.bf16.mxu0 0
        %813 = vmatpush1.bf16.msra.mxu0 0
        %814 = vmatprep.subr.bf16.mxu0 0
        %815 = vmatpush1.bf16.msra.mxu0 0
        %816 = vmatprep.subr.bf16.mxu0 0
        %817 = vmatpush1.bf16.msra.mxu0 0
        %818 = vmatprep.subr.bf16.mxu0 0
        %819 = vmatpush1.bf16.msra.mxu0 0
        %820 = vmatprep.subr.bf16.mxu0 0
        %821 = vmatpush1.bf16.msra.mxu0 0
        %822 = vmatprep.subr.bf16.mxu0 0
        %823 = vmatpush1.bf16.msra.mxu0 0
        %824 = vmatprep.subr.bf16.mxu0 0
        %825 = vmatpush1.bf16.msra.mxu0 0
        %826 = vmatprep.subr.bf16.mxu0 0
        %827 = vmatpush1.bf16.msra.mxu0 0
        %828 = vmatprep.subr.bf16.mxu0 0
        %829 = vmatpush1.bf16.msra.mxu0 0
        %830 = vmatprep.mubr.bf16.mxu0 0
        %831 = vmatmul.mubr.bf16.gmra.mrb[0].mxu0 %v385
        %v832 = vpop.f32.mrb[0].mxu0
        %v833 = vadd.f32 0.0, %v832
        %v834 = vpop.f32.mrb[0].mxu0
        %v835 = vpop.f32.mrb[0].mxu0
        %v836 = vpop.f32.mrb[0].mxu0
        %837 = vdwg.mxu0
        %v838 = vld [vmem:[%s3 + $0x2] sm:$0x1]
        %v839 = vlaneseq
        %v840 = vshrl.u32 %v839, 7
        %v841 = vsub.s32 0, %v840
        %v842 = vrot.slane %v838, %v841
        %v843 = vadd.f32 %v790, %v842
        %v844 = vadd.f32 %v833, %v842
        %v845 = vtanh.pop %v843
        %v846 = vtanh.pop %v844
        %v847 = vpack.c.bf16 %v846, %v845
        %s848 = scalar_lea.vmem [#allocation6], 192
        %v849 = vld [vmem:[%s848] sm:$0xf]
        %v850 = vld [vmem:[%s848 + $0x4] sm:$0xf]
        %v851 = vld [vmem:[%s848 + $0x8] sm:$0xf]
        %v852 = vld [vmem:[%s848 + $0xc] sm:$0xf]
        %v853 = vld [vmem:[%s848 + $0x10] sm:$0xf]
        %v854 = vld [vmem:[%s848 + $0x14] sm:$0xf]
        %v855 = vld [vmem:[%s848 + $0x18] sm:$0xf]
        %v856 = vld [vmem:[%s848 + $0x1c] sm:$0xf]
        %v857 = vld [vmem:[%s848 + $0x20] sm:$0xf]
        %v858 = vld [vmem:[%s848 + $0x24] sm:$0xf]
        %v859 = vld [vmem:[%s848 + $0x28] sm:$0xf]
        %v860 = vld [vmem:[%s848 + $0x2c] sm:$0xf]
        %v861 = vld [vmem:[%s848 + $0x30] sm:$0xf]
        %v862 = vld [vmem:[%s848 + $0x34] sm:$0xf]
        %v863 = vld [vmem:[%s848 + $0x38] sm:$0xf]
        %v864 = vld [vmem:[%s848 + $0x3c] sm:$0xf]
        %v881 = vunpack.c.l.b16 %v849
        %v882 = vunpack.c.l.b16 %v850
        %v883 = vunpack.c.l.b16 %v851
        %v884 = vunpack.c.l.b16 %v852
        %v885 = vunpack.c.l.b16 %v853
        %v886 = vunpack.c.l.b16 %v854
        %v887 = vunpack.c.l.b16 %v855
        %v888 = vunpack.c.l.b16 %v856
        %v889 = vunpack.c.l.b16 %v857
        %v890 = vunpack.c.l.b16 %v858
        %v891 = vunpack.c.l.b16 %v859
        %v892 = vunpack.c.l.b16 %v860
        %v893 = vunpack.c.l.b16 %v861
        %v894 = vunpack.c.l.b16 %v862
        %v895 = vunpack.c.l.b16 %v863
        %v896 = vunpack.c.l.b16 %v864
        %v897 = vpack.c.b16 %v882, %v881
        %v898 = vpack.c.b16 %v884, %v883
        %v899 = vpack.c.b16 %v886, %v885
        %v900 = vpack.c.b16 %v888, %v887
        %v901 = vpack.c.b16 %v890, %v889
        %v902 = vpack.c.b16 %v892, %v891
        %v903 = vpack.c.b16 %v894, %v893
        %v904 = vpack.c.b16 %v896, %v895
        %913 = vmatprep.subr.bf16.mxu0 0
        %914 = vmatpush1.bf16.msra.mxu0 %v897
        %915 = vmatprep.subr.bf16.mxu0 0
        %916 = vmatpush1.bf16.msra.mxu0 %v898
        %917 = vmatprep.subr.bf16.mxu0 0
        %918 = vmatpush1.bf16.msra.mxu0 %v899
        %919 = vmatprep.subr.bf16.mxu0 0
        %920 = vmatpush1.bf16.msra.mxu0 %v900
        %921 = vmatprep.subr.bf16.mxu0 0
        %922 = vmatpush1.bf16.msra.mxu0 %v901
        %923 = vmatprep.subr.bf16.mxu0 0
        %924 = vmatpush1.bf16.msra.mxu0 %v902
        %925 = vmatprep.subr.bf16.mxu0 0
        %926 = vmatpush1.bf16.msra.mxu0 %v903
        %927 = vmatprep.subr.bf16.mxu0 0
        %928 = vmatpush1.bf16.msra.mxu0 %v904
        %929 = vmatprep.subr.bf16.mxu0 0
        %930 = vmatpush1.bf16.msra.mxu0 0
        %931 = vmatprep.subr.bf16.mxu0 0
        %932 = vmatpush1.bf16.msra.mxu0 0
        %933 = vmatprep.subr.bf16.mxu0 0
        %934 = vmatpush1.bf16.msra.mxu0 0
        %935 = vmatprep.subr.bf16.mxu0 0
        %936 = vmatpush1.bf16.msra.mxu0 0
        %937 = vmatprep.subr.bf16.mxu0 0
        %938 = vmatpush1.bf16.msra.mxu0 0
        %939 = vmatprep.subr.bf16.mxu0 0
        %940 = vmatpush1.bf16.msra.mxu0 0
        %941 = vmatprep.subr.bf16.mxu0 0
        %942 = vmatpush1.bf16.msra.mxu0 0
        %943 = vmatprep.subr.bf16.mxu0 0
        %944 = vmatpush1.bf16.msra.mxu0 0
        %945 = vmatprep.mubr.bf16.mxu0 0
        %946 = vmatmul.mubr.bf16.gmra.mrb[0].mxu0 %v847
        %v947 = vpop.f32.mrb[0].mxu0
        %v948 = vadd.f32 0.0, %v947
        %v949 = vpop.f32.mrb[0].mxu0
        %v950 = vpop.f32.mrb[0].mxu0
        %v951 = vadd.f32 0.0, %v950
        %v952 = vpop.f32.mrb[0].mxu0
        %953 = vdwg.mxu0
        %v954 = vpack.c.bf16 %v948, %v948
        %v955 = vpack.c.bf16 %v951, %v951
        %v957 = vsel %vm340, %v954, 0
        %959 = vmatprep.subr.bf16.mxu0 0
        %960 = vmatpush1.bf16.msra.mxu0 %v957
        %961 = vmatprep.subr.bf16.mxu0 0
        %962 = vmatpush1.bf16.msra.mxu0 0
        %963 = vmatprep.subr.bf16.mxu0 0
        %964 = vmatpush1.bf16.msra.mxu0 0
        %965 = vmatprep.subr.bf16.mxu0 0
        %966 = vmatpush1.bf16.msra.mxu0 0
        %967 = vmatprep.subr.bf16.mxu0 0
        %968 = vmatpush1.bf16.msra.mxu0 0
        %969 = vmatprep.subr.bf16.mxu0 0
        %970 = vmatpush1.bf16.msra.mxu0 0
        %971 = vmatprep.subr.bf16.mxu0 0
        %972 = vmatpush1.bf16.msra.mxu0 0
        %973 = vmatprep.subr.bf16.mxu0 0
        %974 = vmatpush1.bf16.msra.mxu0 0
        %975 = vmatprep.subr.bf16.mxu0 0
        %976 = vmatpush1.bf16.msra.mxu0 0
        %977 = vmatprep.subr.bf16.mxu0 0
        %978 = vmatpush1.bf16.msra.mxu0 0
        %979 = vmatprep.subr.bf16.mxu0 0
        %980 = vmatpush1.bf16.msra.mxu0 0
        %981 = vmatprep.subr.bf16.mxu0 0
        %982 = vmatpush1.bf16.msra.mxu0 0
        %983 = vmatprep.subr.bf16.mxu0 0
        %984 = vmatpush1.bf16.msra.mxu0 0
        %985 = vmatprep.subr.bf16.mxu0 0
        %986 = vmatpush1.bf16.msra.mxu0 0
        %987 = vmatprep.subr.bf16.mxu0 0
        %988 = vmatpush1.bf16.msra.mxu0 0
        %989 = vmatprep.subr.bf16.mxu0 0
        %990 = vmatpush1.bf16.msra.mxu0 0
        %991 = vmatprep.mubr.bf16.mxu0 0
        %992 = vmatmul.mubr.bf16.gmra.mrb[0].mxu0 %v338
        %v993 = vpop.f32.mrb[0].mxu0
        %v994 = vadd.f32 0.0, %v993
        %v995 = vpop.f32.mrb[0].mxu0
        %v996 = vpop.f32.mrb[0].mxu0
        %v997 = vpop.f32.mrb[0].mxu0
        %998 = vdwg.mxu0
        %v1000 = vsel %vm340, %v955, 0
        %1002 = vmatprep.subr.bf16.mxu0 0
        %1003 = vmatpush1.bf16.msra.mxu0 %v1000
        %1004 = vmatprep.subr.bf16.mxu0 0
        %1005 = vmatpush1.bf16.msra.mxu0 0
        %1006 = vmatprep.subr.bf16.mxu0 0
        %1007 = vmatpush1.bf16.msra.mxu0 0
        %1008 = vmatprep.subr.bf16.mxu0 0
        %1009 = vmatpush1.bf16.msra.mxu0 0
        %1010 = vmatprep.subr.bf16.mxu0 0
        %1011 = vmatpush1.bf16.msra.mxu0 0
        %1012 = vmatprep.subr.bf16.mxu0 0
        %1013 = vmatpush1.bf16.msra.mxu0 0
        %1014 = vmatprep.subr.bf16.mxu0 0
        %1015 = vmatpush1.bf16.msra.mxu0 0
        %1016 = vmatprep.subr.bf16.mxu0 0
        %1017 = vmatpush1.bf16.msra.mxu0 0
        %1018 = vmatprep.subr.bf16.mxu0 0
        %1019 = vmatpush1.bf16.msra.mxu0 0
        %1020 = vmatprep.subr.bf16.mxu0 0
        %1021 = vmatpush1.bf16.msra.mxu0 0
        %1022 = vmatprep.subr.bf16.mxu0 0
        %1023 = vmatpush1.bf16.msra.mxu0 0
        %1024 = vmatprep.subr.bf16.mxu0 0
        %1025 = vmatpush1.bf16.msra.mxu0 0
        %1026 = vmatprep.subr.bf16.mxu0 0
        %1027 = vmatpush1.bf16.msra.mxu0 0
        %1028 = vmatprep.subr.bf16.mxu0 0
        %1029 = vmatpush1.bf16.msra.mxu0 0
        %1030 = vmatprep.subr.bf16.mxu0 0
        %1031 = vmatpush1.bf16.msra.mxu0 0
        %1032 = vmatprep.subr.bf16.mxu0 0
        %1033 = vmatpush1.bf16.msra.mxu0 0
        %1034 = vmatprep.mubr.bf16.mxu0 0
        %1035 = vmatmul.mubr.bf16.gmra.mrb[0].mxu0 %v385
        %v1036 = vpop.f32.mrb[0].mxu0
        %v1037 = vadd.f32 0.0, %v1036
        %v1038 = vpop.f32.mrb[0].mxu0
        %v1039 = vpop.f32.mrb[0].mxu0
        %v1040 = vpop.f32.mrb[0].mxu0
        %1041 = vdwg.mxu0
        %v1042 = vld [vmem:[%s3 + $0x3] sm:$0x1]
        %v1043 = vlaneseq
        %v1044 = vshrl.u32 %v1043, 7
        %v1045 = vsub.s32 0, %v1044
        %v1046 = vrot.slane %v1042, %v1045
        %v1047 = vadd.f32 %v994, %v1046
        %v1048 = vadd.f32 %v1037, %v1046
        %v1049 = vlaneseq
        %v1050 = vand.u32 %v1049, 127
        %vm1051 = vcmp.ge.s32.totalorder %v1050, 2
        %vm1052 = vcmp.lt.s32.totalorder %v1050, 6
        %vm1053 = vmand %vm1051, %vm1052
        %v1054 = vsel %vm1053, %v1047, -1e+30
        %v1055 = vsel %vm1053, %v1048, -1e+30
        %1056 = vmax.xlane.f32.xlu0 %v1054
        %v1057 = vpop.xlane.xlu0 %1056
        %1058 = vmax.xlane.f32.xlu0 %v1055
        %v1059 = vpop.xlane.xlu0 %1058
        %v1060 = vsub.f32 %v1054, %v1057
        %v1061 = vsub.f32 %v1055, %v1059
        %v1062 = vmul.f32 %v1060, 1.442695
        %v1063 = vpow.pop %v1062
        %v1064 = vmul.f32 %v1061, 1.442695
        %v1065 = vpow.pop %v1064
        %1066 = vadd.xlane.f32.xlu0 %v1063
        %v1067 = vpop.xlane.xlu0 %1066
        %1068 = vadd.xlane.f32.xlu0 %v1065
        %v1069 = vpop.xlane.xlu0 %1068
        %v1070 = vlog2.pop %v1067
        %v1071 = vmul.f32 %v1070, 0.6931472
        %v1072 = vlog2.pop %v1069
        %v1073 = vmul.f32 %v1072, 0.6931472
        %v1074 = vadd.f32 %v1071, %v1057
        %v1075 = vadd.f32 %v1073, %v1059
        %v1076 = vsub.f32 %v1054, %v1074
        %v1077 = vsub.f32 %v1055, %v1075
        %v1078 = vsel %vm1053, %v1076, 0.0
        %v1079 = vsel %vm1053, %v1077, 0.0
        %vm1080 = vcmp.lt.s32.totalorder %v1050, 2
        %v1081 = vsel %vm1080, %v845, %v1078
        %v1082 = vsel %vm1080, %v846, %v1079
        %1083 = vst [vmem:[%s273] sm:$0xff] %v1081
        %1084 = vst [vmem:[%s273 + $0x8] sm:$0xff] %v1082
        %s1085 = smul.u32 2, %s21
        %p1086 = scmp.lt.s32.totalorder %s1085, 3
        %s1087 = scalar_select %p1086, %s1085, 3
        %s1088 = smul.addr %s1087, 8
        %s1089 = scalar_lea.vmem %s4, %s1088
        // Predicated region
        $region49: #{net_forward.1} parent=35 // pred_check
          %p1090 = pneg %p133
        $region50: #{net_forward.1} parent=35 // pred_check_branch
          %1092 = sbr.rel (%p1090) target = $region52
        $region51: #{net_forward.1} parent=35 // pred_region
          %s1093 = smul.u32 2, %s21
        $region52: #{net_forward.1} parent=35 // pred_fallthru
          _
      $region36: #{net_forward.1} parent=5 // pred_fallthru
        _
      %p1094 = scmp.le.s32.totalorder 2, %s16
      // Predicated region
      $region53: #{net_forward.1} parent=5 // pred_check
        %p1095 = pneg %p1094
      $region54: #{net_forward.1} parent=5 // pred_check_branch
        %1097 = sbr.rel (%p1095) target = $region56
      $region55: #{net_forward.1} parent=5 // pred_region
        %s1098 = ssub.s32 %s16, 2
        // Predicated region
        $region57: #{net_forward.1} parent=55 // pred_check
          %p1099 = pneg %p139
        $region58: #{net_forward.1} parent=55 // pred_check_branch
          %1101 = sbr.rel (%p1099) target = $region60
        $region59: #{net_forward.1} parent=55 // pred_region
          %s1102 = smul.u32 2, %s22
          %p1103 = scmp.lt.s32.totalorder %s1102, 3
          %s1104 = scalar_select %p1103, %s1102, 3
          %s1105 = smul.addr %s1104, 8
          %s1106 = scalar_lea.vmem %s4, %s1105
        $region60: #{net_forward.1} parent=55 // pred_fallthru
          _
      $region56: #{net_forward.1} parent=5 // pred_fallthru
        _
    $region6: #{net_forward.1} parent=1 // loop_footer
      %s20 = sadd.s32 1, %s16
    $region7: #{net_forward.1} parent=1 // loop_footer_branch
      %15 = sbr.rel target = $region3
    $region8: #{net_forward.1} parent=1 // loop_exit
      _
    %1107 = vsyncpa [#allocation3], 1
    %s1108 = scalar_lea.sflag [#allocation3], 1
    %1109 = vsyncpa %s1108, 1
    %1110 = vsyncpa [#allocation5], 1
    %s1111 = scalar_lea.sflag [#allocation5], 1
    %1112 = vsyncpa %s1111, 1

</llo_original>
